<compile_context>
chip_gen: v6e
topology: v6e:2x2x1
jax: 0.10.0
libtpu: 0.0.40
codegen_flags: <defaults>
</compile_context>

<pallas_src>
import jax
import jax.numpy as jnp
from jax.experimental import pallas as pl
from jax.experimental.pallas import tpu as pltpu


_BETA = 10.0          # torch.nn.Softplus(beta=10)
_INV_BETA = 1.0 / _BETA
_THRESHOLD = 20.0     # torch default threshold (applied to beta * x)
_LANE = 128
_SUBLANE = 8


def _round_up(n, m):
    return pl.cdiv(n, m) * m


# --------------------------------------------------------------------------
# Kernel
# --------------------------------------------------------------------------
def _predictor_kernel(x_ref, w1_ref, b1_ref, w2_ref, b2_ref, y_ref):
    """One batch tile of the 2-layer MLP.

    x_ref : [TB, D]  f32 VMEM
    w1_ref: [D, HP]  f32 VMEM   (hidden padded 100 -> 128, exact zero pad)
    b1_ref: [1, HP]  f32 VMEM
    w2_ref: [1, HP]  f32 VMEM   (layer-2 weight as a lane-dense row)
    b2_ref: [1]      f32 SMEM   (scalar bias)
    y_ref : [1, TB]  f32 VMEM   (lane-dense output row)
    """
    x = x_ref[...]

    # Layer 1 on the MXU, f32 accumulation.  Padded hidden columns of w1/b1
    # are zero, so they only ever produce softplus(0) values that are later
    # multiplied by w2 == 0.
    h = jnp.dot(x, w1_ref[...], preferred_element_type=jnp.float32) + b1_ref[...]

    # Softplus(beta=10), torch semantics:
    #   beta*x > threshold -> x ; else log1p(exp(beta*x)) / beta
    # The divide is folded into a constant multiply (one fewer EUP pass).
    bh = _BETA * h
    sp = jnp.where(bh > _THRESHOLD, h, jnp.log1p(jnp.exp(bh)) * _INV_BETA)

    # Layer 2, lane-dense: y [1, TB] = w2 [1, HP] @ sp [TB, HP]^T.
    # Contracting the last dims (q.K^T pattern) gives the batch dimension in
    # lanes directly, so the output store is a full-lane vst (no masked
    # 1-lane partial stores) and no XLU relayout is needed.
    y = jax.lax.dot_general(
        w2_ref[...], sp,
        dimension_numbers=(((1,), (1,)), ((), ())),
        preferred_element_type=jnp.float32)

    y_ref[...] = y + b2_ref[0]


# --------------------------------------------------------------------------
# Wrapper
# --------------------------------------------------------------------------
def pad_predictor_params(w1, b1, w2, b2):
    """One-time layout prep (call once at init / param update, not per step).

    Returns (w1p [D,HP], b1p [1,HP], w2p [1,HP], b2p [1]) with HP = hidden
    rounded up to a lane multiple (exact zero padding).
    """
    D, H = w1.shape
    HP = _round_up(H, _LANE)
    w1p = jnp.zeros((D, HP), jnp.float32).at[:, :H].set(w1.astype(jnp.float32))
    b1p = jnp.zeros((1, HP), jnp.float32).at[:, :H].set(
        b1.reshape(1, H).astype(jnp.float32))
    w2p = jnp.zeros((1, HP), jnp.float32).at[:, :H].set(
        w2.reshape(1, H).astype(jnp.float32))
    b2p = b2.reshape(1).astype(jnp.float32)
    return w1p, b1p, w2p, b2p


def _choose_batch_tile(B):
    """Pick (TB, grid) for the batch dimension.

    B <= 512  : one full block (block dims == array dims, no padding, no
                masked stores, minimum grid overhead — best on 1-TC v5e/v6e).
    B  > 512  : lane-aligned tiles (TB multiple of 128 so the partial last
                block is legal for both the x and the lane-dense y BlockSpecs),
                sized for >= 2 grid steps (v7x has 2 TensorCores) and capped
                at 2048 rows so live [TB,128] f32 intermediates (~1 MiB each)
                stay far below v7x's 64 MiB VMEM / 32 MiB scoped default.
    """
    if B <= 512:
        return B, 1
    tb = min(_round_up(pl.cdiv(B, 2), _LANE), 2048)
    return tb, pl.cdiv(B, tb)


@jax.jit
def predictor_forward(x, w1p, b1p, w2p, b2p):
    """Predictor.forward: returns (y [B, 1], reg scalar).

    Expects pre-padded params from `pad_predictor_params`.
    """
    B, D = x.shape
    HP = w1p.shape[1]
    x = x.astype(jnp.float32)

    TB, grid = _choose_batch_tile(B)

    cost = pl.CostEstimate(
        flops=2 * B * D * HP + 2 * B * HP + 5 * B * HP,
        transcendentals=2 * B * HP,                       # exp + log1p
        bytes_accessed=4 * (B * D + D * HP + 3 * HP + 1 + B),
    )

    y_row = pl.pallas_call(
        _predictor_kernel,
        out_shape=jax.ShapeDtypeStruct((1, B), jnp.float32),
        grid=(grid,),
        in_specs=[
            pl.BlockSpec((TB, D), lambda i: (i, 0)),        # x batch tile
            pl.BlockSpec((D, HP), lambda i: (0, 0)),        # w1 (whole)
            pl.BlockSpec((1, HP), lambda i: (0, 0)),        # b1 (whole)
            pl.BlockSpec((1, HP), lambda i: (0, 0)),        # w2 row (whole)
            pl.BlockSpec(memory_space=pltpu.MemorySpace.SMEM),  # b2 scalar
        ],
        out_specs=pl.BlockSpec((1, TB), lambda i: (0, i)),  # lane-dense y row
        compiler_params=pltpu.CompilerParams(
            dimension_semantics=("parallel",)),
        cost_estimate=cost,
    )(x, w1p, b1p, w2p, b2p)

    y = y_row.reshape(B, 1)

    # reg_layers(): ||w1||_1 + ||w2||_1 depends only on the weights, so it is
    # computed in plain JAX (padding zeros contribute nothing to the L1 norm).
    reg = jnp.sum(jnp.abs(w1p)) + jnp.sum(jnp.abs(w2p))
    return y, reg


def init_params(key, input_dim, hidden=100, out_dim=1):
    # Matches LinearLayer init: uniform(-scale, scale), scale = sqrt(6/(in+out))
    k1, k2, k3, k4 = jax.random.split(key, 4)
    s1 = (6.0 / (input_dim + hidden)) ** 0.5
    s2 = (6.0 / (hidden + out_dim)) ** 0.5
    w1 = jax.random.uniform(k1, (input_dim, hidden), jnp.float32, -s1, s1)
    b1 = jax.random.uniform(k2, (hidden,), jnp.float32, -s1, s1)
    w2 = jax.random.uniform(k3, (hidden, out_dim), jnp.float32, -s2, s2)
    b2 = jax.random.uniform(k4, (out_dim,), jnp.float32, -s2, s2)
    return w1, b1, w2, b2


if __name__ == "__main__":
    key = jax.random.PRNGKey(0)
    kx, kp = jax.random.split(key)

    batch = 8
    input_dim = 16   # == len(gene_size)
    hidden = 100

    x = jax.random.normal(kx, (batch, input_dim), jnp.float32)
    w1, b1, w2, b2 = init_params(kp, input_dim, hidden=hidden)

    # One-time layout prep (hoisted out of the forward path).
    w1p, b1p, w2p, b2p = pad_predictor_params(w1, b1, w2, b2)

    y, reg = predictor_forward(x, w1p, b1p, w2p, b2p)
    jax.block_until_ready((y, reg))

    # Pure-JAX reference (torch Softplus(beta=10) semantics).
    h_ref = x @ w1 + b1
    bh = _BETA * h_ref
    sp_ref = jnp.where(bh > _THRESHOLD, h_ref, jnp.log1p(jnp.exp(bh)) / _BETA)
    y_ref = sp_ref @ w2 + b2
    reg_ref = jnp.sum(jnp.abs(w1)) + jnp.sum(jnp.abs(w2))

    assert y.shape == (batch, 1)
    # Tolerance leaves headroom for matmul precision-pass / accumulation-order
    # differences between the Pallas/Mosaic dots and XLA's reference matmuls.
    assert jnp.allclose(y, y_ref, atol=5e-3, rtol=5e-3)
    assert jnp.allclose(reg, reg_ref, atol=1e-4, rtol=1e-4)

    print("KERNEL_OK")
</pallas_src>

<mosaic_0001>
module attributes {stable_mosaic.version = 11 : i64} {
  func.func @_predictor_kernel(%arg0: i32, %arg1: memref<8x16xf32, #tpu.memory_space<vmem>>, %arg2: memref<16x128xf32, #tpu.memory_space<vmem>>, %arg3: memref<1x128xf32, #tpu.memory_space<vmem>>, %arg4: memref<1x128xf32, #tpu.memory_space<vmem>>, %arg5: memref<1xf32, #tpu.memory_space<smem>>, %arg6: memref<1x8xf32, #tpu.memory_space<vmem>>) attributes {dimension_semantics = [#tpu.dimension_semantics<parallel>], iteration_bounds = array<i64: 1>, scalar_prefetch = 0 : i64, scratch_operands = 0 : i64, tpu.core_type = #tpu.core_type<tc>, window_params = [{transform_indices = @transform_0, window_bounds = array<i64: 8, 16>}, {pipeline_mode = #tpu.pipeline_mode<synchronous>, transform_indices = @transform_1, window_bounds = array<i64: 16, 128>}, {pipeline_mode = #tpu.pipeline_mode<synchronous>, transform_indices = @transform_2, window_bounds = array<i64: 1, 128>}, {pipeline_mode = #tpu.pipeline_mode<synchronous>, transform_indices = @transform_3, window_bounds = array<i64: 1, 128>}, {transform_indices = @transform_4, window_bounds = array<i64: 1>}, {transform_indices = @transform_5, window_bounds = array<i64: 1, 8>}]} {
    %c0 = arith.constant 0 : index
    %c0_0 = arith.constant 0 : index
    %0 = vector.load %arg1[%c0, %c0_0] : memref<8x16xf32, #tpu.memory_space<vmem>>, vector<8x16xf32>
    %c0_1 = arith.constant 0 : index
    %c0_2 = arith.constant 0 : index
    %1 = vector.load %arg2[%c0_1, %c0_2] : memref<16x128xf32, #tpu.memory_space<vmem>>, vector<16x128xf32>
    %cst = arith.constant dense<0.000000e+00> : vector<8x128xf32>
    %2 = tpu.matmul %0, %1, %cst {dimension_numbers = #tpu.dot_dimension_numbers<[1], [0], [0], [1], [0, 0, 1, 1], [], []>} : vector<8x16xf32>, vector<16x128xf32>, vector<8x128xf32> -> vector<8x128xf32>
    %c0_3 = arith.constant 0 : index
    %c0_4 = arith.constant 0 : index
    %3 = vector.load %arg3[%c0_3, %c0_4] : memref<1x128xf32, #tpu.memory_space<vmem>>, vector<1x128xf32>
    %4 = vector.broadcast %3 : vector<1x128xf32> to vector<8x128xf32>
    %5 = arith.addf %2, %4 : vector<8x128xf32>
    %cst_5 = arith.constant 1.000000e+01 : f32
    %6 = vector.broadcast %cst_5 : f32 to vector<8x128xf32>
    %7 = arith.mulf %6, %5 : vector<8x128xf32>
    %cst_6 = arith.constant 2.000000e+01 : f32
    %8 = vector.broadcast %cst_6 : f32 to vector<8x128xf32>
    %9 = arith.cmpf ogt, %7, %8 : vector<8x128xf32>
    %10 = math.exp %7 : vector<8x128xf32>
    %11 = math.log1p %10 : vector<8x128xf32>
    %cst_7 = arith.constant 1.000000e-01 : f32
    %12 = vector.broadcast %cst_7 : f32 to vector<8x128xf32>
    %13 = arith.mulf %11, %12 : vector<8x128xf32>
    %14 = arith.select %9, %5, %13 : vector<8x128xi1>, vector<8x128xf32>
    %c0_8 = arith.constant 0 : index
    %c0_9 = arith.constant 0 : index
    %15 = vector.load %arg4[%c0_8, %c0_9] : memref<1x128xf32, #tpu.memory_space<vmem>>, vector<1x128xf32>
    %cst_10 = arith.constant dense<0.000000e+00> : vector<1x8xf32>
    %16 = tpu.matmul %15, %14, %cst_10 {dimension_numbers = #tpu.dot_dimension_numbers<[1], [1], [0], [0], [0, 0, 1, 0], [], []>} : vector<1x128xf32>, vector<8x128xf32>, vector<1x8xf32> -> vector<1x8xf32>
    %c0_11 = arith.constant 0 : index
    %17 = memref.load %arg5[%c0_11] : memref<1xf32, #tpu.memory_space<smem>>
    %18 = vector.broadcast %17 : f32 to vector<1x8xf32>
    %19 = arith.addf %16, %18 : vector<1x8xf32>
    %c0_12 = arith.constant 0 : index
    %c0_13 = arith.constant 0 : index
    %20 = vector.load %arg6[%c0_12, %c0_13] : memref<1x8xf32, #tpu.memory_space<vmem>>, vector<1x8xf32>
    tpu.vector_store %arg6[%c0_12, %c0_13], %19 {strides = array<i32>} : memref<1x8xf32, #tpu.memory_space<vmem>>, vector<1x8xf32>,
    return
  }
  func.func @transform_0(%arg0: i32) -> (i32, i32) {
    %c0_i32 = arith.constant 0 : i32
    %c0_i32_0 = arith.constant 0 : i32
    return %arg0, %c0_i32 : i32, i32
  }
  func.func @transform_1(%arg0: i32) -> (i32, i32) {
    %c0_i32 = arith.constant 0 : i32
    %c0_i32_0 = arith.constant 0 : i32
    %c0_i32_1 = arith.constant 0 : i32
    return %c0_i32, %c0_i32_0 : i32, i32
  }
  func.func @transform_2(%arg0: i32) -> (i32, i32) {
    %c0_i32 = arith.constant 0 : i32
    %c0_i32_0 = arith.constant 0 : i32
    %c0_i32_1 = arith.constant 0 : i32
    return %c0_i32, %c0_i32_0 : i32, i32
  }
  func.func @transform_3(%arg0: i32) -> (i32, i32) {
    %c0_i32 = arith.constant 0 : i32
    %c0_i32_0 = arith.constant 0 : i32
    %c0_i32_1 = arith.constant 0 : i32
    return %c0_i32, %c0_i32_0 : i32, i32
  }
  func.func @transform_4(%arg0: i32) -> i32 {
    %c0_i32 = arith.constant 0 : i32
    %c0_i32_0 = arith.constant 0 : i32
    return %c0_i32 : i32
  }
  func.func @transform_5(%arg0: i32) -> (i32, i32) {
    %c0_i32 = arith.constant 0 : i32
    %c0_i32_0 = arith.constant 0 : i32
    return %c0_i32, %arg0 : i32, i32
  }
}

</mosaic_0001>

<llo_original>
// kernel: predictor_forward.1
$region0: #{predictor_forward.1}
  #allocation0 [shape = 'u32[]', space=smem, size = 0x4, offset = 0x4, fixed_abs, tag = 'smem constant byte address 0x4 - core index']
  #allocation1 [shape = 'u32[144,128]{1,0:T(1,128)}', space=vmem, size = 0x12000, scoped, tag = 'internal scratch']
  #allocation2 [shape = 'f32[1]{0:T(128)S(6)}', space=smem, size = 0x200, scoped, tag = 'scoped memory for predictor_forward.1']
  %s0 = inlined_call_operand.vmem [shape: f32[8,16], index: 0, kind: input, shape index: {}]
  %s1 = inlined_call_operand.vmem [shape: f32[16,128], index: 1, kind: input, shape index: {}]
  %s2 = inlined_call_operand.vmem [shape: f32[1,128], index: 2, kind: input, shape index: {}]
  %s3 = inlined_call_operand.vmem [shape: f32[1,128], index: 3, kind: input, shape index: {}]
  %s4 = inlined_call_operand.<no memory space> [shape: f32[1], index: 4, kind: input, shape index: {}]
  %s5 = inlined_call_operand.hbm [shape: f32[1,8], index: 5, kind: output, shape index: {}]
  %s6 = sld [smem:[#allocation0]]
  $region30: #{predictor_forward.1} parent=0
    _
  %s8 = ssub.s32 1, %s6
  %s9 = scalar_select 0, %s8, %s6
  %10 = sst [smem:[#allocation2]] %s4
  $region1: #{predictor_forward.1} parent=0
    #allocation3 [shape = 'u8[512]{0}', space=vmem, size = 0x400, scoped, tag = 'output window, operand 0, single buffered']
    #allocation4 [shape = 's32[1]{0}', space=sflag, size = 0x4, scoped, tag = 'scoped memory for predictor_forward.1']
    %11 = vsyncpa [#allocation4], 0
    // Predicated region
    $region2: #{predictor_forward.1} parent=1 // pred_check
      _
    $region3: #{predictor_forward.1} parent=1 // pred_check_branch
      %13 = sbr.rel (0) target = $region5
    $region4: #{predictor_forward.1} parent=1 // pred_region
      _
    $region5: #{predictor_forward.1} parent=1 // pred_fallthru
      _
    // Predicated region
    $region6: #{predictor_forward.1} parent=1 // pred_check
      _
    $region7: #{predictor_forward.1} parent=1 // pred_check_branch
      %15 = sbr.rel (0) target = $region9
    $region8: #{predictor_forward.1} parent=1 // pred_region
      _
    $region9: #{predictor_forward.1} parent=1 // pred_fallthru
      _
    // Predicated region
    $region10: #{predictor_forward.1} parent=1 // pred_check
      _
    $region11: #{predictor_forward.1} parent=1 // pred_check_branch
      %17 = sbr.rel (0) target = $region13
    $region12: #{predictor_forward.1} parent=1 // pred_region
      _
    $region13: #{predictor_forward.1} parent=1 // pred_fallthru
      _
    // Predicated region
    $region14: #{predictor_forward.1} parent=1 // pred_check
      _
    $region15: #{predictor_forward.1} parent=1 // pred_check_branch
      %19 = sbr.rel (0) target = $region17
    $region16: #{predictor_forward.1} parent=1 // pred_region
      _
    $region17: #{predictor_forward.1} parent=1 // pred_fallthru
      _
    // Predicated region
    $region18: #{predictor_forward.1} parent=1 // pred_check
      _
    $region19: #{predictor_forward.1} parent=1 // pred_check_branch
      %21 = sbr.rel (0) target = $region21
    $region20: #{predictor_forward.1} parent=1 // pred_region
      _
    $region21: #{predictor_forward.1} parent=1 // pred_fallthru
      _
    %v22 = vld [vmem:[%s0] sm:$0xff]
    %v23 = vld [vmem:[%s1] sm:$0xff]
    %v24 = vld [vmem:[%s1 + $0x8] sm:$0xff]
    %v25 = vld [vmem:[%s2] sm:$0x1]
    %v27 = vlaneseq
    %v28 = vshrl.u32 %v27, 7
    %v29 = vsub.s32 0, %v28
    %v30 = vrot.slane %v25, %v29
    %vm32 = vcmask 130048
    %v34 = vsel %vm32, %v22, 0
    %36 = vmatprep.subr.mxu0 0.0
    %37 = vmatpush1.msra.mxu0 0.0
    %38 = vmatprep.subr.mxu0 0.0
    %39 = vmatpush1.msra.mxu0 0.0
    %40 = vmatprep.subr.mxu0 0.0
    %41 = vmatpush1.msra.mxu0 0.0
    %42 = vmatprep.subr.mxu0 0.0
    %43 = vmatpush1.msra.mxu0 0.0
    %44 = vmatprep.subr.mxu0 0.0
    %45 = vmatpush1.msra.mxu0 0.0
    %46 = vmatprep.subr.mxu0 0.0
    %47 = vmatpush1.msra.mxu0 0.0
    %48 = vmatprep.subr.mxu0 0.0
    %49 = vmatpush1.msra.mxu0 0.0
    %50 = vmatprep.subr.mxu0 0.0
    %51 = vmatpush1.msra.mxu0 0.0
    %52 = vmatprep.subr.mxu0 0.0
    %53 = vmatpush1.msra.mxu0 0.0
    %54 = vmatprep.subr.mxu0 0.0
    %55 = vmatpush1.msra.mxu0 0.0
    %56 = vmatprep.subr.mxu0 0.0
    %57 = vmatpush1.msra.mxu0 0.0
    %58 = vmatprep.subr.mxu0 0.0
    %59 = vmatpush1.msra.mxu0 0.0
    %60 = vmatprep.subr.mxu0 0.0
    %61 = vmatpush1.msra.mxu0 0.0
    %62 = vmatprep.subr.mxu0 0.0
    %63 = vmatpush1.msra.mxu0 0.0
    %64 = vmatprep.subr.mxu0 0.0
    %65 = vmatpush1.msra.mxu0 %v24
    %66 = vmatprep.subr.mxu0 0.0
    %67 = vmatpush1.msra.mxu0 %v23
    %68 = vmatprep.subr.mxu0 0.0
    %69 = vmatpush2.msra.mxu0 0.0
    %70 = vmatprep.subr.mxu0 0.0
    %71 = vmatpush2.msra.mxu0 0.0
    %72 = vmatprep.subr.mxu0 0.0
    %73 = vmatpush2.msra.mxu0 0.0
    %74 = vmatprep.subr.mxu0 0.0
    %75 = vmatpush2.msra.mxu0 0.0
    %76 = vmatprep.subr.mxu0 0.0
    %77 = vmatpush2.msra.mxu0 0.0
    %78 = vmatprep.subr.mxu0 0.0
    %79 = vmatpush2.msra.mxu0 0.0
    %80 = vmatprep.subr.mxu0 0.0
    %81 = vmatpush2.msra.mxu0 0.0
    %82 = vmatprep.subr.mxu0 0.0
    %83 = vmatpush2.msra.mxu0 0.0
    %84 = vmatprep.subr.mxu0 0.0
    %85 = vmatpush2.msra.mxu0 0.0
    %86 = vmatprep.subr.mxu0 0.0
    %87 = vmatpush2.msra.mxu0 0.0
    %88 = vmatprep.subr.mxu0 0.0
    %89 = vmatpush2.msra.mxu0 0.0
    %90 = vmatprep.subr.mxu0 0.0
    %91 = vmatpush2.msra.mxu0 0.0
    %92 = vmatprep.subr.mxu0 0.0
    %93 = vmatpush2.msra.mxu0 0.0
    %94 = vmatprep.subr.mxu0 0.0
    %95 = vmatpush2.msra.mxu0 0.0
    %96 = vmatprep.subr.mxu0 0.0
    %97 = vmatpush2.msra.mxu0 0.0
    %98 = vmatprep.subr.mxu0 0.0
    %99 = vmatpush2.msra.mxu0 0.0
    %100 = vmatprep.mubr.f32.mxu0 0.0
    %101 = vmatmul.mubr.f32.gmra.mxu0 %v34
    %v102 = vpop.f32.mrf.mxu0
    %v103 = vadd.f32 %v30, %v102
    %v104 = vpop.f32.mrf.mxu0
    %105 = vdwg.mxu0
    %v106 = vmul.f32 %v103, 10.0
    %vm107 = vcmp.gt.f32.partialorder %v106, 20.0
    %v108 = vmul.f32 %v106, 1.442695
    %v109 = vpow.pop %v108
    %v110 = vadd.f32 %v109, 1.0
    %v111 = vlog2.pop %v110
    %v112 = vmul.f32 %v111, 0.6931472
    %v113 = vmul.f32 -0.5, %v109
    %v114 = vadd.f32 %v113, 1.0
    %v115 = vmul.f32 %v114, %v109
    %v116 = vand.u32 2147483647, %v109
    %vm117 = vcmp.lt.f32.partialorder %v116, 0.0004427343
    %v118 = vsel %vm117, %v115, %v112
    %v119 = vmul.f32 %v118, 0.1
    %v120 = vsel %vm107, %v103, %v119
    %v121 = vld [vmem:[%s3] sm:$0x1]
    %s122 = sld [smem:[#allocation2]]
    %v123 = vstv %s122
    %124 = vmatprep.subr.mxu0 0.0
    %125 = vmatpush1.xpose.msra.mxu0 0.0
    %126 = vmatprep.subr.mxu0 0.0
    %127 = vmatpush1.xpose.msra.mxu0 0.0
    %128 = vmatprep.subr.mxu0 0.0
    %129 = vmatpush1.xpose.msra.mxu0 0.0
    %130 = vmatprep.subr.mxu0 0.0
    %131 = vmatpush1.xpose.msra.mxu0 0.0
    %132 = vmatprep.subr.mxu0 0.0
    %133 = vmatpush1.xpose.msra.mxu0 0.0
    %134 = vmatprep.subr.mxu0 0.0
    %135 = vmatpush1.xpose.msra.mxu0 0.0
    %136 = vmatprep.subr.mxu0 0.0
    %137 = vmatpush1.xpose.msra.mxu0 0.0
    %138 = vmatprep.subr.mxu0 0.0
    %139 = vmatpush1.xpose.msra.mxu0 0.0
    %140 = vmatprep.subr.mxu0 0.0
    %141 = vmatpush1.xpose.msra.mxu0 0.0
    %142 = vmatprep.subr.mxu0 0.0
    %143 = vmatpush1.xpose.msra.mxu0 0.0
    %144 = vmatprep.subr.mxu0 0.0
    %145 = vmatpush1.xpose.msra.mxu0 0.0
    %146 = vmatprep.subr.mxu0 0.0
    %147 = vmatpush1.xpose.msra.mxu0 0.0
    %148 = vmatprep.subr.mxu0 0.0
    %149 = vmatpush1.xpose.msra.mxu0 0.0
    %150 = vmatprep.subr.mxu0 0.0
    %151 = vmatpush1.xpose.msra.mxu0 0.0
    %152 = vmatprep.subr.mxu0 0.0
    %153 = vmatpush1.xpose.msra.mxu0 0.0
    %154 = vmatprep.subr.mxu0 0.0
    %155 = vmatpush1.xpose.msra.mxu0 %v120
    %156 = vmatprep.subr.mxu0 0.0
    %157 = vmatpush2.xpose.msra.mxu0 0.0
    %158 = vmatprep.subr.mxu0 0.0
    %159 = vmatpush2.xpose.msra.mxu0 0.0
    %160 = vmatprep.subr.mxu0 0.0
    %161 = vmatpush2.xpose.msra.mxu0 0.0
    %162 = vmatprep.subr.mxu0 0.0
    %163 = vmatpush2.xpose.msra.mxu0 0.0
    %164 = vmatprep.subr.mxu0 0.0
    %165 = vmatpush2.xpose.msra.mxu0 0.0
    %166 = vmatprep.subr.mxu0 0.0
    %167 = vmatpush2.xpose.msra.mxu0 0.0
    %168 = vmatprep.subr.mxu0 0.0
    %169 = vmatpush2.xpose.msra.mxu0 0.0
    %170 = vmatprep.subr.mxu0 0.0
    %171 = vmatpush2.xpose.msra.mxu0 0.0
    %172 = vmatprep.subr.mxu0 0.0
    %173 = vmatpush2.xpose.msra.mxu0 0.0
    %174 = vmatprep.subr.mxu0 0.0
    %175 = vmatpush2.xpose.msra.mxu0 0.0
    %176 = vmatprep.subr.mxu0 0.0
    %177 = vmatpush2.xpose.msra.mxu0 0.0
    %178 = vmatprep.subr.mxu0 0.0
    %179 = vmatpush2.xpose.msra.mxu0 0.0
    %180 = vmatprep.subr.mxu0 0.0
    %181 = vmatpush2.xpose.msra.mxu0 0.0
    %182 = vmatprep.subr.mxu0 0.0
    %183 = vmatpush2.xpose.msra.mxu0 0.0
    %184 = vmatprep.subr.mxu0 0.0
    %185 = vmatpush2.xpose.msra.mxu0 0.0
    %186 = vmatprep.subr.mxu0 0.0
    %187 = vmatpush2.xpose.msra.mxu0 0.0
    %188 = vmatprep.mubr.f32.mxu0 0.0
    %189 = vmatmul.mubr.f32.gmra.mxu0 %v121
    %v190 = vpop.f32.mrf.mxu0
    %v191 = vadd.f32 %v123, %v190
    %v192 = vpop.f32.mrf.mxu0
    %193 = vdwg.mxu0
    %vm194 = vcmask 57344
    %195 = vst.msk [vmem:[#allocation3] sm:$0x1] %vm194, %v191
    // Predicated region
    $region22: #{predictor_forward.1} parent=1 // pred_check
      _
    $region23: #{predictor_forward.1} parent=1 // pred_check_branch
      %197 = sbr.rel (0) target = $region25
    $region24: #{predictor_forward.1} parent=1 // pred_region
      %s199 = ssub.s32 16, 16
      %200 = vsyncadd [#allocation4], %s199
      %s202 = sshll.u32 [#allocation3], 4
      %s203 = int_to_ptr.vmem [resolvable:$true] %s202
      %205 = dma.vmem_to_hbm [thread:$0]  %s203, 16, %s5, [#allocation4]
    $region25: #{predictor_forward.1} parent=1 // pred_fallthru
      _
    // Predicated region
    $region26: #{predictor_forward.1} parent=1 // pred_check
      _
    $region27: #{predictor_forward.1} parent=1 // pred_check_branch
      %207 = sbr.rel (0) target = $region29
    $region28: #{predictor_forward.1} parent=1 // pred_region
      %208 = dma.done [#allocation4], 16
    $region29: #{predictor_forward.1} parent=1 // pred_fallthru
      _
    %209 = vsyncpa [#allocation4], 1

</llo_original>
